<compile_context>
chip_gen: v6e
topology: v6e:2x2x1
jax: 0.10.0
libtpu: 0.0.40
codegen_flags: <defaults>
</compile_context>

<pallas_src>
import functools

import jax
import jax.numpy as jnp
from jax.experimental import pallas as pl
from jax.experimental.pallas import tpu as pltpu


def _round_up(x, m):
    return ((x + m - 1) // m) * m


# ---------------------------------------------------------------------------
# Kernel: lane-dense broadcast add.
#   emb_ref: (rows_pad, 1) f32 — whole per-(b,c) bias column, VMEM-resident.
#   x_ref / o_ref: (TM, TN) tile of x.reshape(B*C, H*W).
# ---------------------------------------------------------------------------
def _bcast_add_kernel(emb_ref, x_ref, o_ref, *, block_rows):
    row0 = pl.multiple_of(pl.program_id(0) * block_rows, 8)
    e = emb_ref[pl.ds(row0, block_rows), :]             # (TM, 1) f32
    o_ref[...] = (x_ref[...] + e).astype(o_ref.dtype)   # add in f32, round once


def _choose_tiles(rows, hw):
    # Fixed (8,128)-aligned tiles; edge tiles are handled by the cdiv grid.
    # Cap: 256 * 8192 * 4 B = 8 MiB per block.
    tm = min(256, _round_up(rows, 8))
    tn = min(8192, _round_up(hw, 128))
    # Keep >= 2 grid steps along a 'parallel' axis when the problem is big
    # enough to split, so both v7x TensorCores get work.
    if pl.cdiv(rows, tm) * pl.cdiv(hw, tn) < 2:
        if tn >= 256:
            tn = _round_up(tn // 2, 128)
        elif tm >= 16:
            tm = _round_up(tm // 2, 8)
    return tm, tn


def time_dimension_matching(x, time_embedded, w, b, *, donate_x=False):
    """x: (B, C, H, W); time_embedded: (B, Cin);
       w: (Cin, C) (transposed from PyTorch's (C, Cin)); b: (C,)."""
    B, C, H, W = x.shape
    rows, HW = B * C, H * W

    # Tiny SiLU + GEMM + bias: a B-row matmul that under-fills the MXU no
    # matter what — left to XLA instead of a second pallas_call launch.
    emb = (jax.nn.silu(time_embedded) @ w + b).astype(jnp.float32)   # (B, C)

    TM, TN = _choose_tiles(rows, HW)
    grid = (pl.cdiv(rows, TM), pl.cdiv(HW, TN))

    # Whole emb column resident in VMEM (constant index map -> DMA'd once);
    # padded to the grid extent so the in-kernel dynamic slice never runs OOB.
    rows_pad = grid[0] * TM
    emb_col = jnp.pad(emb.reshape(rows, 1), ((0, rows_pad - rows), (0, 0)))

    x2 = x.reshape(rows, HW)   # sublane axis = B*C, lane axis = H*W

    extra = {}
    if donate_x:
        extra["input_output_aliases"] = {1: 0}   # alias x2 -> out (caller donates x)

    out = pl.pallas_call(
        functools.partial(_bcast_add_kernel, block_rows=TM),
        out_shape=jax.ShapeDtypeStruct((rows, HW), x.dtype),
        grid=grid,
        in_specs=[
            pl.BlockSpec((rows_pad, 1), lambda i, j: (0, 0)),   # resident emb column
            pl.BlockSpec((TM, TN), lambda i, j: (i, j)),        # x tile
        ],
        out_specs=pl.BlockSpec((TM, TN), lambda i, j: (i, j)),
        compiler_params=pltpu.CompilerParams(
            dimension_semantics=("parallel", "parallel"),
            vmem_limit_bytes=48 * 1024 * 1024,
        ),
        **extra,
    )(emb_col, x2)

    return out.reshape(B, C, H, W)


def _reference(x, t, w, b):
    emb = jax.nn.silu(t) @ w + b
    return x + emb[:, :, None, None]


if __name__ == "__main__":
    # Small deterministic shapes consistent with the module.
    B, Cin, Cout, H, W = 2, 32, 4, 16, 16

    key = jax.random.PRNGKey(0)
    k_x, k_t, k_w, k_b = jax.random.split(key, 4)

    x = jax.random.normal(k_x, (B, Cout, H, W), dtype=jnp.float32)
    time_embedded = jax.random.normal(k_t, (B, Cin), dtype=jnp.float32)

    # Deterministic Linear(Cin -> Cout) init (kaiming-uniform-like bound).
    bound = 1.0 / (Cin ** 0.5)
    w = jax.random.uniform(k_w, (Cin, Cout), jnp.float32, -bound, bound)
    b = jax.random.uniform(k_b, (Cout,), jnp.float32, -bound, bound)

    out = time_dimension_matching(x, time_embedded, w, b)
    out = jax.block_until_ready(out)

    ref = _reference(x, time_embedded, w, b)
    assert out.shape == (B, Cout, H, W)
    assert jnp.allclose(out, ref, atol=1e-5, rtol=1e-5)

    print("KERNEL_OK")
</pallas_src>

<mosaic_0001>
module attributes {stable_mosaic.version = 11 : i64} {
  func.func @_bcast_add_kernel(%arg0: i32, %arg1: i32, %arg2: memref<8x1xf32, #tpu.memory_space<vmem>>, %arg3: memref<8x128xf32, #tpu.memory_space<vmem>>, %arg4: memref<8x128xf32, #tpu.memory_space<vmem>>) attributes {dimension_semantics = [#tpu.dimension_semantics<parallel>, #tpu.dimension_semantics<parallel>], iteration_bounds = array<i64: 1, 2>, scalar_prefetch = 0 : i64, scratch_operands = 0 : i64, tpu.core_type = #tpu.core_type<tc>, window_params = [{pipeline_mode = #tpu.pipeline_mode<synchronous>, transform_indices = @transform_0, window_bounds = array<i64: 8, 1>}, {transform_indices = @transform_1, window_bounds = array<i64: 8, 128>}, {transform_indices = @transform_2, window_bounds = array<i64: 8, 128>}]} {
    %c8_i32 = arith.constant 8 : i32
    %0 = arith.muli %arg0, %c8_i32 : i32
    %1 = tpu.assume_multiple %0, 8 : i32
    %2 = arith.index_cast %1 : i32 to index
    %c0 = arith.constant 0 : index
    %3 = vector.load %arg2[%2, %c0] : memref<8x1xf32, #tpu.memory_space<vmem>>, vector<8x1xf32>
    %c0_0 = arith.constant 0 : index
    %c0_1 = arith.constant 0 : index
    %4 = vector.load %arg3[%c0_0, %c0_1] : memref<8x128xf32, #tpu.memory_space<vmem>>, vector<8x128xf32>
    %5 = vector.broadcast %3 : vector<8x1xf32> to vector<8x128xf32>
    %6 = arith.addf %4, %5 : vector<8x128xf32>
    %c0_2 = arith.constant 0 : index
    %c0_3 = arith.constant 0 : index
    %7 = vector.load %arg4[%c0_2, %c0_3] : memref<8x128xf32, #tpu.memory_space<vmem>>, vector<8x128xf32>
    tpu.vector_store %arg4[%c0_2, %c0_3], %6 {strides = array<i32>} : memref<8x128xf32, #tpu.memory_space<vmem>>, vector<8x128xf32>,
    return
  }
  func.func @transform_0(%arg0: i32, %arg1: i32) -> (i32, i32) {
    %c0_i32 = arith.constant 0 : i32
    %c0_i32_0 = arith.constant 0 : i32
    %c0_i32_1 = arith.constant 0 : i32
    return %c0_i32, %c0_i32_0 : i32, i32
  }
  func.func @transform_1(%arg0: i32, %arg1: i32) -> (i32, i32) {
    %c0_i32 = arith.constant 0 : i32
    return %arg0, %arg1 : i32, i32
  }
  func.func @transform_2(%arg0: i32, %arg1: i32) -> (i32, i32) {
    %c0_i32 = arith.constant 0 : i32
    return %arg0, %arg1 : i32, i32
  }
}

</mosaic_0001>

<llo_original>
// kernel: tpu_custom_call.1
$region0: #{tpu_custom_call.1}
  #allocation0 [shape = 'u32[]', space=smem, size = 0x4, offset = 0x4, fixed_abs, tag = 'smem constant byte address 0x4 - core index']
  #allocation1 [shape = 'u32[144,128]{1,0:T(1,128)}', space=vmem, size = 0x12000, scoped, tag = 'internal scratch']
  %s0 = inlined_call_operand.vmem [shape: f32[8,1], index: 0, kind: input, shape index: {}]
  %s1 = inlined_call_operand.hbm [shape: f32[8,256], index: 1, kind: input, shape index: {}]
  %s2 = inlined_call_operand.hbm [shape: f32[8,256], index: 2, kind: output, shape index: {}]
  %s3 = sld [smem:[#allocation0]]
  $region45: #{tpu_custom_call.1} parent=0
    _
  %s5 = ssub.s32 1, %s3
  %s6 = scalar_select 0, %s5, %s3
  $region1: #{tpu_custom_call.1} parent=0
    #allocation2 [shape = 'u8[8192]{0}', space=vmem, size = 0x2000, scoped, tag = 'input window, operand 1']
    #allocation3 [shape = 's32[2]{0}', space=sflag, size = 0x8, scoped, tag = 'scoped memory for tpu_custom_call.1']
    #allocation4 [shape = 's32[2]{0}', space=sflag, size = 0x8, scoped, tag = 'scoped memory for tpu_custom_call.1']
    #allocation5 [shape = 'u8[8192]{0}', space=vmem, size = 0x2000, scoped, tag = 'output window, operand 0']
    %7 = vsyncpa [#allocation3], 0
    %s8 = scalar_lea.sflag [#allocation3], 1
    %9 = vsyncpa %s8, 0
    %10 = vsyncpa [#allocation4], 0
    %s11 = scalar_lea.sflag [#allocation4], 1
    %12 = vsyncpa %s11, 0
    loop: start=0, step=1, limit=4
    $region2: #{tpu_custom_call.1} parent=1 // loop_pre_header
      _
    $region3: #{tpu_custom_call.1} parent=1 // loop_header
      %s14 = sphi 0, %s18
      %p15 = scmp.ge.s32.totalorder %s14, 4
      %s21 = sphi 0, %s33
      %s22 = sphi 0, %s29
      %s23 = sphi 0, %s21
      %s24 = sphi 0, %s22
      %s25 = sphi 0, %s23
      %s26 = sphi 0, %s24
      %s34 = sphi 0, %s34
      %s36 = sphi 0, %s34
      %s37 = sphi 0, %s36
      %s51 = sphi 0, %s37
      %s59 = sphi 0, %s61
      %s62 = sphi 0, %s59
      %s63 = sphi 0, %s62
      %s79 = sphi 0, %s63
      %s87 = sphi 0, %s89
      %s90 = sphi 0, %s87
      %s91 = sphi 0, %s90
      %s107 = sphi 0, %s91
    $region4: #{tpu_custom_call.1} parent=1 // loop_header_branch
      %17 = sbr.rel (%p15) target = $region8
    $region5: #{tpu_custom_call.1} parent=1 // loop_body
      %s19 = ssub.s32 %s14, 1
      %s20 = ssub.s32 %s14, 2
      %s27 = sadd.s32 1, %s22
      %p28 = scmp.ge.s32.totalorder %s27, 2
      %s29 = scalar_select %p28, 0, %s27
      %s30 = sadd.s32 1, %s21
      %s31 = scalar_select %p28, %s30, %s21
      %p32 = scmp.ge.s32.totalorder %s31, 1
      %s33 = scalar_select %p32, 0, %s31
      %s35 = sadd.s32 %s34, 1
      %p38 = scmp.eq.s32.totalorder %s14, 1
      %p39 = scmp.ne.s32.totalorder %s34, %s36
      %p40 = scmp.eq.s32.totalorder %s14, 0
      %p41 = por %p39, %p40
      %p42 = scmp.ne.s32.totalorder %s34, %s36
      %p43 = scmp.eq.s32.totalorder %s19, 1
      %p44 = por %p42, %p43
      %p45 = scmp.ne.s32.totalorder %s36, %s37
      %p46 = scmp.eq.s32.totalorder %s19, 0
      %p47 = por %p45, %p46
      %p48 = scmp.ne.s32.totalorder %s36, %s37
      %p49 = scmp.eq.s32.totalorder %s20, 1
      %p50 = por %p48, %p49
      %p52 = scmp.ne.s32.totalorder %s37, %s51
      %p53 = scmp.eq.s32.totalorder %s20, 0
      %p54 = por %p52, %p53
      %s55 = ssub.s32 %s21, %s33
      %s56 = ssub.s32 %s22, %s29
      %s57 = sor.u32 %s55, %s56
      %p58 = scmp.eq.s32.totalorder %s57, 0
      %s60 = sadd.s32 %s59, 1
      %s61 = scalar_select %p58, %s59, %s60
      %p64 = pneg %p58
      %p65 = scmp.eq.s32.totalorder %s14, 1
      %p66 = por %p64, %p65
      %p67 = scmp.ne.s32.totalorder %s59, %s62
      %p68 = scmp.eq.s32.totalorder %s14, 0
      %p69 = por %p67, %p68
      %p70 = scmp.ne.s32.totalorder %s59, %s62
      %p71 = scmp.eq.s32.totalorder %s19, 1
      %p72 = por %p70, %p71
      %p73 = scmp.ne.s32.totalorder %s62, %s63
      %p74 = scmp.eq.s32.totalorder %s19, 0
      %p75 = por %p73, %p74
      %p76 = scmp.ne.s32.totalorder %s62, %s63
      %p77 = scmp.eq.s32.totalorder %s20, 1
      %p78 = por %p76, %p77
      %p80 = scmp.ne.s32.totalorder %s63, %s79
      %p81 = scmp.eq.s32.totalorder %s20, 0
      %p82 = por %p80, %p81
      %s83 = ssub.s32 %s21, %s33
      %s84 = ssub.s32 %s22, %s29
      %s85 = sor.u32 %s83, %s84
      %p86 = scmp.eq.s32.totalorder %s85, 0
      %s88 = sadd.s32 %s87, 1
      %s89 = scalar_select %p86, %s87, %s88
      %p92 = pneg %p86
      %p93 = scmp.eq.s32.totalorder %s14, 1
      %p94 = por %p92, %p93
      %p95 = scmp.ne.s32.totalorder %s87, %s90
      %p96 = scmp.eq.s32.totalorder %s14, 0
      %p97 = por %p95, %p96
      %p98 = scmp.ne.s32.totalorder %s87, %s90
      %p99 = scmp.eq.s32.totalorder %s19, 1
      %p100 = por %p98, %p99
      %p101 = scmp.ne.s32.totalorder %s90, %s91
      %p102 = scmp.eq.s32.totalorder %s19, 0
      %p103 = por %p101, %p102
      %p104 = scmp.ne.s32.totalorder %s90, %s91
      %p105 = scmp.eq.s32.totalorder %s20, 1
      %p106 = por %p104, %p105
      %p108 = scmp.ne.s32.totalorder %s91, %s107
      %p109 = scmp.eq.s32.totalorder %s20, 0
      %p110 = por %p108, %p109
      %p111 = scmp.le.s32.totalorder 1, %s14
      %p112 = scmp.lt.s32.totalorder %s14, 3
      %p113 = pnand %p111, %p112
      %p114 = pneg %p113
      // Predicated region
      $region9: #{tpu_custom_call.1} parent=5 // pred_check
        _
      $region10: #{tpu_custom_call.1} parent=5 // pred_check_branch
        %116 = sbr.rel (%p113) target = $region12
      $region11: #{tpu_custom_call.1} parent=5 // pred_region
        %s117 = ssub.s32 %s14, 1
        // Predicated region
        $region13: #{tpu_custom_call.1} parent=11 // pred_check
          %p118 = pneg %p47
        $region14: #{tpu_custom_call.1} parent=11 // pred_check_branch
          %120 = sbr.rel (%p118) target = $region16
        $region15: #{tpu_custom_call.1} parent=11 // pred_region
          _
        $region16: #{tpu_custom_call.1} parent=11 // pred_fallthru
          _
      $region12: #{tpu_custom_call.1} parent=5 // pred_fallthru
        _
      %p121 = scmp.lt.s32.totalorder %s14, 2
      // Predicated region
      $region17: #{tpu_custom_call.1} parent=5 // pred_check
        %p122 = pneg %p121
      $region18: #{tpu_custom_call.1} parent=5 // pred_check_branch
        %124 = sbr.rel (%p122) target = $region20
      $region19: #{tpu_custom_call.1} parent=5 // pred_region
        // Predicated region
        $region21: #{tpu_custom_call.1} parent=19 // pred_check
          %p125 = pneg %p69
        $region22: #{tpu_custom_call.1} parent=19 // pred_check_branch
          %127 = sbr.rel (%p125) target = $region24
        $region23: #{tpu_custom_call.1} parent=19 // pred_region
          %s128 = sand.u32 %s59, 1
          %s129 = scalar_lea.sflag [#allocation3], %s128
          %s130 = sand.u32 %s59, 1
          %s131 = smul.addr %s130, 8
          %s132 = scalar_lea.vmem [#allocation2], %s131
          %s134 = ssub.s32 128, 128
          %135 = vsyncadd %s129, %s134
          %s136 = smul.addr %s21, 2
          %s137 = sadd.s32 %s22, %s136
          %s138 = smul.addr %s137, 128
          %s139 = scalar_lea.hbm %s1, %s138
          %s141 = sshll.u32 %s132, 4
          %s142 = int_to_ptr.vmem [resolvable:$true] %s141
          %144 = dma.hbm_to_vmem [thread:$0]  %s139, 128, %s142, %s129
        $region24: #{tpu_custom_call.1} parent=19 // pred_fallthru
          _
      $region20: #{tpu_custom_call.1} parent=5 // pred_fallthru
        _
      %p145 = scmp.le.s32.totalorder 1, %s14
      %p146 = scmp.lt.s32.totalorder %s14, 3
      %p147 = pnand %p145, %p146
      %p148 = pneg %p147
      // Predicated region
      $region25: #{tpu_custom_call.1} parent=5 // pred_check
        _
      $region26: #{tpu_custom_call.1} parent=5 // pred_check_branch
        %150 = sbr.rel (%p147) target = $region28
      $region27: #{tpu_custom_call.1} parent=5 // pred_region
        %s151 = ssub.s32 %s14, 1
        %s152 = sand.u32 %s62, 1
        %s153 = scalar_lea.sflag [#allocation3], %s152
        %s154 = sand.u32 %s62, 1
        %s155 = smul.addr %s154, 8
        %s156 = scalar_lea.vmem [#allocation2], %s155
        // Predicated region
        $region29: #{tpu_custom_call.1} parent=27 // pred_check
          %p157 = pneg %p75
        $region30: #{tpu_custom_call.1} parent=27 // pred_check_branch
          %159 = sbr.rel (%p157) target = $region32
        $region31: #{tpu_custom_call.1} parent=27 // pred_region
          %160 = dma.done %s153, 128
        $region32: #{tpu_custom_call.1} parent=27 // pred_fallthru
          _
        %p161 = pneg %p47
        %p162 = pneg %p44
        %s163 = sand.u32 %s62, 1
        %s164 = scalar_lea.sflag [#allocation3], %s163
        %s165 = sand.u32 %s62, 1
        %s166 = smul.addr %s165, 8
        %s167 = scalar_lea.vmem [#allocation2], %s166
        %p168 = pneg %p75
        %p169 = pneg %p72
        %p170 = pneg %p103
        %p171 = pneg %p100
        %s172 = sand.u32 %s90, 1
        %s173 = scalar_lea.sflag [#allocation4], %s172
        %s174 = sand.u32 %s90, 1
        %s175 = smul.addr %s174, 8
        %s176 = scalar_lea.vmem [#allocation5], %s175
        %s177 = smul.u32 %s23, 8
        %s178 = scalar_lea.vmem %s0, %s177
        %v179 = vld [vmem:[%s178] sm:$0xff]
        %v180 = vld [vmem:[%s156] sm:$0xff]
        %182 = vset.pattern.permute.xlu0 0
        %183 = vperm.xlu0 %182, %v179
        %v184 = vpop.permute.xlu0 %183
        %v186 = vadd.f32 %v180, %v184
        %187 = vst [vmem:[%s176] sm:$0xff] %v186
        %s188 = sand.u32 %s90, 1
        %s189 = scalar_lea.sflag [#allocation4], %s188
        %s190 = sand.u32 %s90, 1
        %s191 = smul.addr %s190, 8
        %s192 = scalar_lea.vmem [#allocation5], %s191
        // Predicated region
        $region33: #{tpu_custom_call.1} parent=27 // pred_check
          %p193 = pneg %p100
        $region34: #{tpu_custom_call.1} parent=27 // pred_check_branch
          %195 = sbr.rel (%p193) target = $region36
        $region35: #{tpu_custom_call.1} parent=27 // pred_region
          %s197 = ssub.s32 128, 128
          %198 = vsyncadd %s189, %s197
          %s199 = smul.addr %s23, 2
          %s200 = sadd.s32 %s24, %s199
          %s201 = smul.addr %s200, 128
          %s202 = scalar_lea.hbm %s2, %s201
          %s204 = sshll.u32 %s192, 4
          %s205 = int_to_ptr.vmem [resolvable:$true] %s204
          %207 = dma.vmem_to_hbm [thread:$0]  %s205, 128, %s202, %s189
        $region36: #{tpu_custom_call.1} parent=27 // pred_fallthru
          _
      $region28: #{tpu_custom_call.1} parent=5 // pred_fallthru
        _
      %p208 = scmp.le.s32.totalorder 2, %s14
      // Predicated region
      $region37: #{tpu_custom_call.1} parent=5 // pred_check
        %p209 = pneg %p208
      $region38: #{tpu_custom_call.1} parent=5 // pred_check_branch
        %211 = sbr.rel (%p209) target = $region40
      $region39: #{tpu_custom_call.1} parent=5 // pred_region
        %s212 = ssub.s32 %s14, 2
        // Predicated region
        $region41: #{tpu_custom_call.1} parent=39 // pred_check
          %p213 = pneg %p106
        $region42: #{tpu_custom_call.1} parent=39 // pred_check_branch
          %215 = sbr.rel (%p213) target = $region44
        $region43: #{tpu_custom_call.1} parent=39 // pred_region
          %s216 = sand.u32 %s91, 1
          %s217 = scalar_lea.sflag [#allocation4], %s216
          %s218 = sand.u32 %s91, 1
          %s219 = smul.addr %s218, 8
          %s220 = scalar_lea.vmem [#allocation5], %s219
          %221 = dma.done %s217, 128
        $region44: #{tpu_custom_call.1} parent=39 // pred_fallthru
          _
      $region40: #{tpu_custom_call.1} parent=5 // pred_fallthru
        _
    $region6: #{tpu_custom_call.1} parent=1 // loop_footer
      %s18 = sadd.s32 1, %s14
    $region7: #{tpu_custom_call.1} parent=1 // loop_footer_branch
      %13 = sbr.rel target = $region3
    $region8: #{tpu_custom_call.1} parent=1 // loop_exit
      _
    %222 = vsyncpa [#allocation3], 1
    %s223 = scalar_lea.sflag [#allocation3], 1
    %224 = vsyncpa %s223, 1
    %225 = vsyncpa [#allocation4], 1
    %s226 = scalar_lea.sflag [#allocation4], 1
    %227 = vsyncpa %s226, 1

</llo_original>
